<compile_context>
chip_gen: v6e
topology: v6e:2x2x1
jax: 0.10.0
libtpu: 0.0.40
codegen_flags: <defaults>
</compile_context>

<pallas_src>
import functools

import jax
import jax.numpy as jnp
from jax import lax
from jax.experimental import pallas as pl
from jax.experimental.pallas import tpu as pltpu


def _round_up(x, m):
    return ((x + m - 1) // m) * m


def _linear_kernel(x_ref, w_ref, b_ref, o_ref, acc_ref):
    # x_ref:   (tm, tk)  activation tile
    # w_ref:   (tn, tk)  weight tile in native (D_out, D_in) layout (no transpose in HBM)
    # b_ref:   (1,  tn)  bias tile
    # o_ref:   (tm, tn)  output tile (written only on the last k step)
    # acc_ref: (tm, tn)  f32 accumulator scratch, resident across the k axis
    k = pl.program_id(2)

    @pl.when(k == 0)
    def _():
        acc_ref[...] = jnp.zeros_like(acc_ref)

    # Contract the last dims of x (tm, tk) and w (tn, tk) -> (tm, tn) on the MXU.
    acc_ref[...] += lax.dot_general(
        x_ref[...],
        w_ref[...],
        dimension_numbers=(((1,), (1,)), ((), ())),
        preferred_element_type=jnp.float32,
    )

    @pl.when(k == pl.num_programs(2) - 1)
    def _():
        # Bias added exactly once, in f32, then cast to the output dtype.
        o_ref[...] = (acc_ref[...] + b_ref[...].astype(jnp.float32)).astype(o_ref.dtype)


def _tiled_linear(x2d, weight, bias, out_dtype, *, tm_max=256, tn_max=1024, tk_max=512):
    """y = x2d @ weight.T + bias via a tiled Pallas matmul. Shapes: x2d (M, K), weight (N, K)."""
    M, K = x2d.shape
    N = weight.shape[0]

    # Tile sizes: clamp to the (rounded-up) problem size; keep lane dims
    # multiples of 128 and sublane dims multiples of 8.
    tm = min(tm_max, _round_up(M, 8))
    tn = min(tn_max, _round_up(N, 128))
    tk = min(tk_max, _round_up(K, 128))

    Mp, Np, Kp = _round_up(M, tm), _round_up(N, tn), _round_up(K, tk)

    # Pad only when the problem size is not already a tile multiple
    # (production sizes usually are, so no extra HBM pass in the common case).
    xp = x2d if (Mp, Kp) == (M, K) else jnp.pad(x2d, ((0, Mp - M), (0, Kp - K)))
    wp = weight if (Np, Kp) == (N, K) else jnp.pad(weight, ((0, Np - N), (0, Kp - K)))
    bp = bias if Np == N else jnp.pad(bias, (0, Np - N))
    bp = bp.reshape(1, Np)

    grid = (Mp // tm, Np // tn, Kp // tk)

    out_itemsize = jnp.dtype(out_dtype).itemsize
    cost = pl.CostEstimate(
        flops=2 * Mp * Np * Kp,
        transcendentals=0,
        bytes_accessed=(
            xp.size * xp.dtype.itemsize
            + wp.size * wp.dtype.itemsize
            + Mp * Np * out_itemsize
        ),
    )

    out = pl.pallas_call(
        _linear_kernel,
        out_shape=jax.ShapeDtypeStruct((Mp, Np), out_dtype),
        grid_spec=pltpu.PrefetchScalarGridSpec(
            num_scalar_prefetch=0,
            grid=grid,
            in_specs=[
                pl.BlockSpec((tm, tk), lambda i, j, k: (i, k)),   # activations
                pl.BlockSpec((tn, tk), lambda i, j, k: (j, k)),   # weight (D_out, D_in)
                pl.BlockSpec((1, tn), lambda i, j, k: (0, j)),    # bias
            ],
            out_specs=pl.BlockSpec((tm, tn), lambda i, j, k: (i, j)),
            scratch_shapes=[pltpu.VMEM((tm, tn), jnp.float32)],
        ),
        compiler_params=pltpu.CompilerParams(
            dimension_semantics=("parallel", "parallel", "arbitrary"),
            vmem_limit_bytes=64 * 1024 * 1024,
        ),
        cost_estimate=cost,
    )(xp, wp, bp)

    if (Mp, Np) != (M, N):
        out = out[:M, :N]
    return out


@functools.partial(jax.jit, static_argnames=("compute_dtype", "force_pallas"))
def cls_proj_forward(cls_embed, weight, bias, *, compute_dtype=None, force_pallas=False):
    """cls_embed: (..., D_in); weight: (D_out, D_in); bias: (D_out,).

    compute_dtype: optionally cast matmul operands (e.g. jnp.bfloat16) for full
    MXU throughput; accumulation stays f32 and the output keeps the input dtype.
    """
    orig_shape = cls_embed.shape
    D_in = orig_shape[-1]
    D_out = weight.shape[0]
    out_dtype = cls_embed.dtype

    x2d = cls_embed.reshape(-1, D_in)
    M = x2d.shape[0]

    if compute_dtype is not None:
        x2d = x2d.astype(compute_dtype)
        weight = weight.astype(compute_dtype)

    # Tiny-shape fast path: below roughly one MXU tile of work the fixed
    # per-call/DMA overhead of a Pallas kernel exceeds the compute.
    tiny = (M * D_in * D_out) < (128 * 128 * 128)
    if tiny and not force_pallas:
        out = (
            jnp.dot(x2d, weight.T, preferred_element_type=jnp.float32)
            + bias.astype(jnp.float32)
        ).astype(out_dtype)
    else:
        out = _tiled_linear(x2d, weight, bias, out_dtype)

    return out.reshape(*orig_shape[:-1], D_out)


def init_cls_proj_params(key, input_dim, output_dim, dtype=jnp.float32):
    # trunc_normal_(weight, std=0.02) (truncated at +/- 2 std), bias = 0.
    w_key, _ = jax.random.split(key)
    weight = (
        jax.random.truncated_normal(
            w_key, -2.0, 2.0, shape=(output_dim, input_dim), dtype=jnp.float32
        )
        * 0.02
    ).astype(dtype)
    bias = jnp.zeros((output_dim,), dtype=dtype)
    return weight, bias


if __name__ == "__main__":
    key = jax.random.PRNGKey(0)
    k_in, k_param = jax.random.split(key)

    # Small example shapes consistent with the module's forward:
    # cls_embed: (batch=2, seq=8, input_dim=32) -> output_dim=64
    B, S, D_in, D_out = 2, 8, 32, 64

    cls_embed = jax.random.normal(k_in, (B, S, D_in), dtype=jnp.float32)
    weight, bias = init_cls_proj_params(k_param, D_in, D_out)

    # force_pallas=True so the demo exercises the tiled Pallas kernel even at
    # these tiny shapes (production tiny shapes take the XLA fast path).
    out = cls_proj_forward(cls_embed, weight, bias, force_pallas=True)
    out = jax.block_until_ready(out)

    # Sanity-check against an exact-precision JAX reference of the same math.
    ref = (
        jnp.dot(cls_embed.reshape(-1, D_in), weight.T, precision=lax.Precision.HIGHEST)
        + bias
    ).reshape(B, S, D_out)
    assert out.shape == (B, S, D_out)
    assert jnp.allclose(out, ref, atol=1e-5, rtol=1e-5)

    print("KERNEL_OK")
</pallas_src>

<mosaic_0001>
module attributes {stable_mosaic.version = 11 : i64} {
  func.func @_linear_kernel(%arg0: i32, %arg1: i32, %arg2: i32, %arg3: memref<16x128xf32, #tpu.memory_space<vmem>>, %arg4: memref<128x128xf32, #tpu.memory_space<vmem>>, %arg5: memref<1x128xf32, #tpu.memory_space<vmem>>, %arg6: memref<16x128xf32, #tpu.memory_space<vmem>>, %arg7: memref<16x128xf32, #tpu.memory_space<vmem>>) attributes {dimension_semantics = [#tpu.dimension_semantics<parallel>, #tpu.dimension_semantics<parallel>, #tpu.dimension_semantics<arbitrary>], iteration_bounds = array<i64: 1, 1, 1>, scalar_prefetch = 0 : i64, scratch_operands = 1 : i64, tpu.core_type = #tpu.core_type<tc>, window_params = [{transform_indices = @transform_0, window_bounds = array<i64: 16, 128>}, {transform_indices = @transform_1, window_bounds = array<i64: 128, 128>}, {transform_indices = @transform_2, window_bounds = array<i64: 1, 128>}, {transform_indices = @transform_3, window_bounds = array<i64: 16, 128>}]} {
    %c0_i32 = arith.constant 0 : i32
    %0 = arith.cmpi eq, %arg2, %c0_i32 : i32
    %1 = arith.extui %0 : i1 to i32
    %c0_i32_0 = arith.constant 0 : i32
    %2 = arith.cmpi ne, %1, %c0_i32_0 : i32
    scf.if %2 {
      %cst_10 = arith.constant 0.000000e+00 : f32
      %12 = vector.broadcast %cst_10 : f32 to vector<16x128xf32>
      %c0_11 = arith.constant 0 : index
      %c0_12 = arith.constant 0 : index
      %13 = vector.load %arg7[%c0_11, %c0_12] : memref<16x128xf32, #tpu.memory_space<vmem>>, vector<16x128xf32>
      tpu.vector_store %arg7[%c0_11, %c0_12], %12 {strides = array<i32>} : memref<16x128xf32, #tpu.memory_space<vmem>>, vector<16x128xf32>,
    } else {
    }
    %c0 = arith.constant 0 : index
    %c0_1 = arith.constant 0 : index
    %3 = vector.load %arg7[%c0, %c0_1] : memref<16x128xf32, #tpu.memory_space<vmem>>, vector<16x128xf32>
    %c0_2 = arith.constant 0 : index
    %c0_3 = arith.constant 0 : index
    %4 = vector.load %arg3[%c0_2, %c0_3] : memref<16x128xf32, #tpu.memory_space<vmem>>, vector<16x128xf32>
    %c0_4 = arith.constant 0 : index
    %c0_5 = arith.constant 0 : index
    %5 = vector.load %arg4[%c0_4, %c0_5] : memref<128x128xf32, #tpu.memory_space<vmem>>, vector<128x128xf32>
    %cst = arith.constant dense<0.000000e+00> : vector<16x128xf32>
    %6 = tpu.matmul %4, %5, %cst {dimension_numbers = #tpu.dot_dimension_numbers<[1], [1], [0], [0], [0, 0, 1, 0], [], []>} : vector<16x128xf32>, vector<128x128xf32>, vector<16x128xf32> -> vector<16x128xf32>
    %7 = arith.addf %3, %6 : vector<16x128xf32>
    %c0_6 = arith.constant 0 : index
    %c0_7 = arith.constant 0 : index
    %8 = vector.load %arg7[%c0_6, %c0_7] : memref<16x128xf32, #tpu.memory_space<vmem>>, vector<16x128xf32>
    tpu.vector_store %arg7[%c0_6, %c0_7], %7 {strides = array<i32>} : memref<16x128xf32, #tpu.memory_space<vmem>>, vector<16x128xf32>,
    %c0_i32_8 = arith.constant 0 : i32
    %9 = arith.cmpi eq, %arg2, %c0_i32_8 : i32
    %10 = arith.extui %9 : i1 to i32
    %c0_i32_9 = arith.constant 0 : i32
    %11 = arith.cmpi ne, %10, %c0_i32_9 : i32
    scf.if %11 {
      %c0_10 = arith.constant 0 : index
      %c0_11 = arith.constant 0 : index
      %12 = vector.load %arg7[%c0_10, %c0_11] : memref<16x128xf32, #tpu.memory_space<vmem>>, vector<16x128xf32>
      %c0_12 = arith.constant 0 : index
      %c0_13 = arith.constant 0 : index
      %13 = vector.load %arg5[%c0_12, %c0_13] : memref<1x128xf32, #tpu.memory_space<vmem>>, vector<1x128xf32>
      %14 = vector.broadcast %13 : vector<1x128xf32> to vector<16x128xf32>
      %15 = arith.addf %12, %14 : vector<16x128xf32>
      %c0_14 = arith.constant 0 : index
      %c0_15 = arith.constant 0 : index
      %16 = vector.load %arg6[%c0_14, %c0_15] : memref<16x128xf32, #tpu.memory_space<vmem>>, vector<16x128xf32>
      tpu.vector_store %arg6[%c0_14, %c0_15], %15 {strides = array<i32>} : memref<16x128xf32, #tpu.memory_space<vmem>>, vector<16x128xf32>,
    } else {
    }
    return
  }
  func.func @transform_0(%arg0: i32, %arg1: i32, %arg2: i32) -> (i32, i32) {
    %c0_i32 = arith.constant 0 : i32
    return %arg0, %arg2 : i32, i32
  }
  func.func @transform_1(%arg0: i32, %arg1: i32, %arg2: i32) -> (i32, i32) {
    %c0_i32 = arith.constant 0 : i32
    return %arg1, %arg2 : i32, i32
  }
  func.func @transform_2(%arg0: i32, %arg1: i32, %arg2: i32) -> (i32, i32) {
    %c0_i32 = arith.constant 0 : i32
    %c0_i32_0 = arith.constant 0 : i32
    return %c0_i32, %arg1 : i32, i32
  }
  func.func @transform_3(%arg0: i32, %arg1: i32, %arg2: i32) -> (i32, i32) {
    %c0_i32 = arith.constant 0 : i32
    return %arg0, %arg1 : i32, i32
  }
}

</mosaic_0001>

<llo_original>
// kernel: cls_proj_forward.1
$region0: #{cls_proj_forward.1}
  #allocation0 [shape = 'u32[]', space=smem, size = 0x4, offset = 0x4, fixed_abs, tag = 'smem constant byte address 0x4 - core index']
  #allocation1 [shape = 'u32[144,128]{1,0:T(1,128)}', space=vmem, size = 0x12000, scoped, tag = 'internal scratch']
  #allocation2 [shape = 'f32[16,128]{1,0:T(8,128)}', space=vmem, size = 0x2000, scoped, tag = 'scratch operand']
  %s0 = inlined_call_operand.vmem [shape: f32[16,128], index: 0, kind: input, shape index: {}]
  %s1 = inlined_call_operand.vmem [shape: f32[128,128], index: 1, kind: input, shape index: {}]
  %s2 = inlined_call_operand.vmem [shape: f32[1,128], index: 2, kind: input, shape index: {}]
  %s3 = inlined_call_operand.vmem [shape: f32[16,128], index: 3, kind: output, shape index: {}]
  %s4 = sld [smem:[#allocation0]]
  $region30: #{cls_proj_forward.1} parent=0
    _
  %s6 = ssub.s32 1, %s4
  %s7 = scalar_select 0, %s6, %s4
  // Predicated region
  $region2: #{cls_proj_forward.1} parent=0 // pred_check
    _
  $region3: #{cls_proj_forward.1} parent=0 // pred_check_branch
    %9 = sbr.rel (0) target = $region5
  $region4: #{cls_proj_forward.1} parent=0 // pred_region
    _
  $region5: #{cls_proj_forward.1} parent=0 // pred_fallthru
    _
  // Predicated region
  $region6: #{cls_proj_forward.1} parent=0 // pred_check
    _
  $region7: #{cls_proj_forward.1} parent=0 // pred_check_branch
    %11 = sbr.rel (0) target = $region9
  $region8: #{cls_proj_forward.1} parent=0 // pred_region
    _
  $region9: #{cls_proj_forward.1} parent=0 // pred_fallthru
    _
  // Predicated region
  $region10: #{cls_proj_forward.1} parent=0 // pred_check
    _
  $region11: #{cls_proj_forward.1} parent=0 // pred_check_branch
    %13 = sbr.rel (0) target = $region13
  $region12: #{cls_proj_forward.1} parent=0 // pred_region
    _
  $region13: #{cls_proj_forward.1} parent=0 // pred_fallthru
    _
  %p14 = scmp.eq.s32.totalorder 0, 0
  // Predicated region
  $region14: #{cls_proj_forward.1} parent=0 // pred_check
    %p15 = pneg %p14
  $region15: #{cls_proj_forward.1} parent=0 // pred_check_branch
    %17 = sbr.rel (%p15) target = $region17
  $region16: #{cls_proj_forward.1} parent=0 // pred_region
    %18 = vst [vmem:[#allocation2] sm:$0xff] 0.0
    %19 = vst [vmem:[#allocation2 + $0x8] sm:$0xff] 0.0
  $region17: #{cls_proj_forward.1} parent=0 // pred_fallthru
    _
  %v20 = vld [vmem:[#allocation2] sm:$0xff]
  %v21 = vld [vmem:[#allocation2 + $0x8] sm:$0xff]
  %v22 = vld [vmem:[%s0] sm:$0xff]
  %v23 = vld [vmem:[%s0 + $0x8] sm:$0xff]
  %v24 = vld [vmem:[%s1] sm:$0xff]
  %v25 = vld [vmem:[%s1 + $0x8] sm:$0xff]
  %v26 = vld [vmem:[%s1 + $0x10] sm:$0xff]
  %v27 = vld [vmem:[%s1 + $0x18] sm:$0xff]
  %v28 = vld [vmem:[%s1 + $0x20] sm:$0xff]
  %v29 = vld [vmem:[%s1 + $0x28] sm:$0xff]
  %v30 = vld [vmem:[%s1 + $0x30] sm:$0xff]
  %v31 = vld [vmem:[%s1 + $0x38] sm:$0xff]
  %v32 = vld [vmem:[%s1 + $0x40] sm:$0xff]
  %v33 = vld [vmem:[%s1 + $0x48] sm:$0xff]
  %v34 = vld [vmem:[%s1 + $0x50] sm:$0xff]
  %v35 = vld [vmem:[%s1 + $0x58] sm:$0xff]
  %v36 = vld [vmem:[%s1 + $0x60] sm:$0xff]
  %v37 = vld [vmem:[%s1 + $0x68] sm:$0xff]
  %v38 = vld [vmem:[%s1 + $0x70] sm:$0xff]
  %v39 = vld [vmem:[%s1 + $0x78] sm:$0xff]
  %40 = vmatprep.subr.mxu0 0.0
  %41 = vmatpush1.xpose.msra.mxu0 %v39
  %42 = vmatprep.subr.mxu0 0.0
  %43 = vmatpush1.xpose.msra.mxu0 %v38
  %44 = vmatprep.subr.mxu0 0.0
  %45 = vmatpush1.xpose.msra.mxu0 %v37
  %46 = vmatprep.subr.mxu0 0.0
  %47 = vmatpush1.xpose.msra.mxu0 %v36
  %48 = vmatprep.subr.mxu0 0.0
  %49 = vmatpush1.xpose.msra.mxu0 %v35
  %50 = vmatprep.subr.mxu0 0.0
  %51 = vmatpush1.xpose.msra.mxu0 %v34
  %52 = vmatprep.subr.mxu0 0.0
  %53 = vmatpush1.xpose.msra.mxu0 %v33
  %54 = vmatprep.subr.mxu0 0.0
  %55 = vmatpush1.xpose.msra.mxu0 %v32
  %56 = vmatprep.subr.mxu0 0.0
  %57 = vmatpush1.xpose.msra.mxu0 %v31
  %58 = vmatprep.subr.mxu0 0.0
  %59 = vmatpush1.xpose.msra.mxu0 %v30
  %60 = vmatprep.subr.mxu0 0.0
  %61 = vmatpush1.xpose.msra.mxu0 %v29
  %62 = vmatprep.subr.mxu0 0.0
  %63 = vmatpush1.xpose.msra.mxu0 %v28
  %64 = vmatprep.subr.mxu0 0.0
  %65 = vmatpush1.xpose.msra.mxu0 %v27
  %66 = vmatprep.subr.mxu0 0.0
  %67 = vmatpush1.xpose.msra.mxu0 %v26
  %68 = vmatprep.subr.mxu0 0.0
  %69 = vmatpush1.xpose.msra.mxu0 %v25
  %70 = vmatprep.subr.mxu0 0.0
  %71 = vmatpush1.xpose.msra.mxu0 %v24
  %72 = vmatprep.subr.mxu0 0.0
  %73 = vmatpush2.xpose.msra.mxu0 0.0
  %74 = vmatprep.subr.mxu0 0.0
  %75 = vmatpush2.xpose.msra.mxu0 0.0
  %76 = vmatprep.subr.mxu0 0.0
  %77 = vmatpush2.xpose.msra.mxu0 0.0
  %78 = vmatprep.subr.mxu0 0.0
  %79 = vmatpush2.xpose.msra.mxu0 0.0
  %80 = vmatprep.subr.mxu0 0.0
  %81 = vmatpush2.xpose.msra.mxu0 0.0
  %82 = vmatprep.subr.mxu0 0.0
  %83 = vmatpush2.xpose.msra.mxu0 0.0
  %84 = vmatprep.subr.mxu0 0.0
  %85 = vmatpush2.xpose.msra.mxu0 0.0
  %86 = vmatprep.subr.mxu0 0.0
  %87 = vmatpush2.xpose.msra.mxu0 0.0
  %88 = vmatprep.subr.mxu0 0.0
  %89 = vmatpush2.xpose.msra.mxu0 0.0
  %90 = vmatprep.subr.mxu0 0.0
  %91 = vmatpush2.xpose.msra.mxu0 0.0
  %92 = vmatprep.subr.mxu0 0.0
  %93 = vmatpush2.xpose.msra.mxu0 0.0
  %94 = vmatprep.subr.mxu0 0.0
  %95 = vmatpush2.xpose.msra.mxu0 0.0
  %96 = vmatprep.subr.mxu0 0.0
  %97 = vmatpush2.xpose.msra.mxu0 0.0
  %98 = vmatprep.subr.mxu0 0.0
  %99 = vmatpush2.xpose.msra.mxu0 0.0
  %100 = vmatprep.subr.mxu0 0.0
  %101 = vmatpush2.xpose.msra.mxu0 0.0
  %102 = vmatprep.subr.mxu0 0.0
  %103 = vmatpush2.xpose.msra.mxu0 0.0
  %104 = vmatprep.mubr.f32.mxu0 0.0
  %105 = vmatmul.mubr.f32.gmra.mxu0 %v22
  %v106 = vpop.f32.mrf.mxu0
  %v107 = vadd.f32 0.0, %v106
  %v108 = vpop.f32.mrf.mxu0
  %109 = vmatprep.mubr.f32.mxu0 0.0
  %110 = vmatmul.mubr.f32.gmra.mxu0 %v23
  %v111 = vpop.f32.mrf.mxu0
  %v112 = vadd.f32 0.0, %v111
  %v113 = vpop.f32.mrf.mxu0
  %114 = vdwg.mxu0
  %v115 = vadd.f32 %v20, %v107
  %v116 = vadd.f32 %v21, %v112
  %117 = vst [vmem:[#allocation2] sm:$0xff] %v115
  %118 = vst [vmem:[#allocation2 + $0x8] sm:$0xff] %v116
  // Predicated region
  $region18: #{cls_proj_forward.1} parent=0 // pred_check
    %p119 = pneg %p14
  $region19: #{cls_proj_forward.1} parent=0 // pred_check_branch
    %121 = sbr.rel (%p119) target = $region21
  $region20: #{cls_proj_forward.1} parent=0 // pred_region
    %v122 = vld [vmem:[#allocation2] sm:$0xff]
    %v123 = vld [vmem:[#allocation2 + $0x8] sm:$0xff]
    %v124 = vld [vmem:[%s2] sm:$0x1]
    %v126 = vlaneseq
    %v127 = vshrl.u32 %v126, 7
    %v128 = vsub.s32 0, %v127
    %v129 = vrot.slane %v124, %v128
    %v131 = vadd.f32 %v122, %v129
    %v132 = vadd.f32 %v123, %v129
    %133 = vst [vmem:[%s3] sm:$0xff] %v131
    %134 = vst [vmem:[%s3 + $0x8] sm:$0xff] %v132
  $region21: #{cls_proj_forward.1} parent=0 // pred_fallthru
    _
  // Predicated region
  $region22: #{cls_proj_forward.1} parent=0 // pred_check
    _
  $region23: #{cls_proj_forward.1} parent=0 // pred_check_branch
    %136 = sbr.rel (0) target = $region25
  $region24: #{cls_proj_forward.1} parent=0 // pred_region
    _
  $region25: #{cls_proj_forward.1} parent=0 // pred_fallthru
    _
  // Predicated region
  $region26: #{cls_proj_forward.1} parent=0 // pred_check
    _
  $region27: #{cls_proj_forward.1} parent=0 // pred_check_branch
    %138 = sbr.rel (0) target = $region29
  $region28: #{cls_proj_forward.1} parent=0 // pred_region
    _
  $region29: #{cls_proj_forward.1} parent=0 // pred_fallthru
    _

</llo_original>
